<compile_context>
chip_gen: v5e
topology: v5e:2x2
jax: 0.10.0
libtpu: 0.0.40
codegen_flags: <defaults>
</compile_context>

<pallas_src>
import functools

import jax
import jax.numpy as jnp
from jax import lax
from jax.experimental import pallas as pl
from jax.experimental.pallas import tpu as pltpu


def _round_up(x, m):
    return (x + m - 1) // m * m


def _style_kernel(feat_ref, target_ref, gram_ref, loss_ref, *,
                  inv_denom, inv_n_gram, k_true, k_tile, needs_mask):
    """One K-tile of the streaming gram-matrix + MSE kernel.

    feat_ref:   (b, Kt)  VMEM  current K tile of the flattened features
    target_ref: (b, b)   VMEM  target gram matrix (resident, constant block)
    gram_ref:   (b, b)   VMEM  output gram matrix; doubles as the accumulator
                               (constant block index across the reduction axis)
    loss_ref:   (1, 1)   SMEM  output scalar MSE loss (written on last step)
    """
    kk = pl.program_id(0)

    @pl.when(kk == 0)
    def _():
        gram_ref[...] = jnp.zeros_like(gram_ref)

    f = feat_ref[...]
    if needs_mask:
        # Zero out lanes past the true (unpadded) K.  This covers both the
        # ragged last tile and any stale data in the overhanging VMEM block,
        # so no pre-kernel padding of the features is ever needed.
        col = lax.broadcasted_iota(jnp.int32, f.shape, 1) + kk * k_tile
        f = jnp.where(col < k_true, f, jnp.zeros_like(f))

    # F @ F.T without materializing a transpose: contract both operands on
    # their last (lane) axis -> straight to the MXU, f32 accumulation.
    gram_ref[...] += lax.dot_general(
        f, f,
        dimension_numbers=(((1,), (1,)), ((), ())),
        preferred_element_type=jnp.float32,
    )

    @pl.when(kk == pl.num_programs(0) - 1)
    def _():
        g = gram_ref[...] * inv_denom
        gram_ref[...] = g
        diff = g - target_ref[...].astype(jnp.float32)
        loss_ref[0, 0] = jnp.sum(diff * diff) * inv_n_gram


def _choose_k_tile(b, k, itemsize, per_buffer_bytes=8 * 1024 * 1024):
    """Largest 128-lane-aligned K tile with ~8 MiB per pipeline buffer."""
    kt = per_buffer_bytes // max(1, b * itemsize)
    kt = max(128, (kt // 128) * 128)
    return kt


def gram_and_style_loss(features, target_gram, *, k_tile=None):
    """features: (b, K) any float dtype; target_gram: (b, b) f32.

    Returns (gram (b, b) f32, loss (1, 1) f32).
    """
    b, k = features.shape
    denom = float(b * k * 2)                     # b * c * d * 2   (K = c * d)
    itemsize = jnp.dtype(features.dtype).itemsize
    kt = k_tile if k_tile is not None else _choose_k_tile(b, k, itemsize)
    kt = max(128, (kt // 128) * 128)             # 128-lane aligned
    kt = min(kt, _round_up(k, 128))              # never stream pure padding
    num_k = pl.cdiv(k, kt)
    needs_mask = (k % kt) != 0                   # only mask the ragged case

    kernel = functools.partial(
        _style_kernel,
        inv_denom=1.0 / denom,
        inv_n_gram=1.0 / float(b * b),
        k_true=k,
        k_tile=kt,
        needs_mask=needs_mask,
    )
    cost = pl.CostEstimate(
        flops=2 * b * b * k,
        transcendentals=0,
        bytes_accessed=b * k * itemsize + 2 * b * b * 4 + 4,
    )
    gram, loss = pl.pallas_call(
        kernel,
        out_shape=(
            jax.ShapeDtypeStruct((b, b), jnp.float32),
            jax.ShapeDtypeStruct((1, 1), jnp.float32),
        ),
        grid_spec=pltpu.PrefetchScalarGridSpec(
            num_scalar_prefetch=0,
            grid=(num_k,),
            in_specs=[
                # Streamed K tiles of the features (double-buffered by Pallas).
                pl.BlockSpec((b, kt), lambda kk: (0, kk)),
                # Target gram: constant block index -> DMA'd once, resident.
                pl.BlockSpec((b, b), lambda kk: (0, 0)),
            ],
            out_specs=[
                # Constant block index across the reduction axis: this block
                # stays resident in VMEM and is used directly as the f32
                # accumulator; written back to HBM only at the end.
                pl.BlockSpec((b, b), lambda kk: (0, 0)),
                # Scalar loss lives in SMEM (no masked (1,1) VMEM store).
                pl.BlockSpec(memory_space=pltpu.MemorySpace.SMEM),
            ],
        ),
        compiler_params=pltpu.CompilerParams(
            dimension_semantics=("arbitrary",),   # K is a reduction axis
            vmem_limit_bytes=48 * 1024 * 1024,
        ),
        cost_estimate=cost,
    )(features, target_gram)
    return gram, loss


def _gram_only(x, *, k_tile):
    b, c, d = x.shape
    feats = x.reshape(b, c * d)
    gram, _ = gram_and_style_loss(
        feats, jnp.zeros((b, b), jnp.float32), k_tile=k_tile)
    return gram


def _style_loss(x, target, *, k_tile):
    b, c, d = x.shape
    feats = x.reshape(b, c * d)
    _, loss = gram_and_style_loss(feats, target, k_tile=k_tile)
    return loss[0, 0]


class StyleLoss:
    """JAX/Pallas port of the PyTorch StyleLoss module."""

    def __init__(self, target_feature, *, k_tile=None):
        # target_feature: (b, c, d)
        self._k_tile = k_tile
        self._gram_fn = jax.jit(functools.partial(_gram_only, k_tile=k_tile))
        self._loss_fn = jax.jit(functools.partial(_style_loss, k_tile=k_tile))
        self.target = jax.lax.stop_gradient(self._gram_fn(target_feature))
        self.loss = None

    def forward(self, x):
        self.loss = self._loss_fn(x, self.target)
        return x  # passthrough, like the PyTorch module

    __call__ = forward


if __name__ == "__main__":
    key = jax.random.PRNGKey(0)
    k1, k2 = jax.random.split(key)

    # Small shapes consistent with gram_matrix's (b, c, d) input convention.
    # K = c*d = 480 is deliberately NOT a multiple of 128, exercising the
    # in-kernel ragged-tile mask (no padding is ever materialized in HBM).
    b, c, d = 4, 8, 60
    target_feature = jax.random.normal(k1, (b, c, d), dtype=jnp.float32)
    x = jax.random.normal(k2, (b, c, d), dtype=jnp.float32)

    # Reference in plain JAX.
    def gram_ref_fn(t):
        bb, cc, dd = t.shape
        f = t.reshape(bb, cc * dd)
        return (f @ f.T) / (bb * cc * dd * 2)

    loss_expect = jnp.mean((gram_ref_fn(x) - gram_ref_fn(target_feature)) ** 2)

    # Exercise both the multi-step path (k_tile=128 -> 4 grid steps, masked
    # ragged last tile) and the default auto-tile path (single 512-wide step).
    for ktile in (128, None):
        module = StyleLoss(target_feature, k_tile=ktile)
        out = jax.block_until_ready(module(x))
        loss = jax.block_until_ready(module.loss)
        assert out.shape == x.shape
        assert jnp.allclose(out, x)
        assert jnp.allclose(loss, loss_expect, rtol=1e-5, atol=1e-6), (
            ktile, loss, loss_expect)

    print("KERNEL_OK")
</pallas_src>

<mosaic_0001>
module attributes {stable_mosaic.version = 11 : i64} {
  func.func @_style_kernel(%arg0: i32, %arg1: memref<4x128xf32, #tpu.memory_space<vmem>>, %arg2: memref<4x4xf32, #tpu.memory_space<vmem>>, %arg3: memref<4x4xf32, #tpu.memory_space<vmem>>, %arg4: memref<1x1xf32, #tpu.memory_space<smem>>) attributes {dimension_semantics = [#tpu.dimension_semantics<arbitrary>], iteration_bounds = array<i64: 4>, scalar_prefetch = 0 : i64, scratch_operands = 0 : i64, tpu.core_type = #tpu.core_type<tc>, window_params = [{transform_indices = @transform_0, window_bounds = array<i64: 4, 128>}, {pipeline_mode = #tpu.pipeline_mode<synchronous>, transform_indices = @transform_1, window_bounds = array<i64: 4, 4>}, {pipeline_mode = #tpu.pipeline_mode<synchronous>, transform_indices = @transform_2, window_bounds = array<i64: 4, 4>}, {transform_indices = @transform_3, window_bounds = array<i64: 1, 1>}]} {
    %c0_i32 = arith.constant 0 : i32
    %0 = arith.cmpi eq, %arg0, %c0_i32 : i32
    %1 = arith.extui %0 : i1 to i32
    %c0_i32_0 = arith.constant 0 : i32
    %2 = arith.cmpi ne, %1, %c0_i32_0 : i32
    scf.if %2 {
      %cst_8 = arith.constant 0.000000e+00 : f32
      %19 = vector.broadcast %cst_8 : f32 to vector<4x4xf32>
      %c0_9 = arith.constant 0 : index
      %c0_10 = arith.constant 0 : index
      %20 = vector.load %arg3[%c0_9, %c0_10] : memref<4x4xf32, #tpu.memory_space<vmem>>, vector<4x4xf32>
      tpu.vector_store %arg3[%c0_9, %c0_10], %19 {strides = array<i32>} : memref<4x4xf32, #tpu.memory_space<vmem>>, vector<4x4xf32>,
    } else {
    }
    %c0 = arith.constant 0 : index
    %c0_1 = arith.constant 0 : index
    %3 = vector.load %arg1[%c0, %c0_1] : memref<4x128xf32, #tpu.memory_space<vmem>>, vector<4x128xf32>
    %4 = tpu.iota {dimensions = array<i32: 1>} : vector<4x128xi32>
    %c128_i32 = arith.constant 128 : i32
    %5 = arith.muli %arg0, %c128_i32 : i32
    %6 = vector.broadcast %5 : i32 to vector<4x128xi32>
    %7 = arith.addi %4, %6 : vector<4x128xi32>
    %c480_i32 = arith.constant 480 : i32
    %8 = vector.broadcast %c480_i32 : i32 to vector<4x128xi32>
    %9 = arith.cmpi slt, %7, %8 : vector<4x128xi32>
    %cst = arith.constant 0.000000e+00 : f32
    %10 = vector.broadcast %cst : f32 to vector<4x128xf32>
    %11 = arith.select %9, %3, %10 : vector<4x128xi1>, vector<4x128xf32>
    %c0_2 = arith.constant 0 : index
    %c0_3 = arith.constant 0 : index
    %12 = vector.load %arg3[%c0_2, %c0_3] : memref<4x4xf32, #tpu.memory_space<vmem>>, vector<4x4xf32>
    %cst_4 = arith.constant dense<0.000000e+00> : vector<4x4xf32>
    %13 = tpu.matmul %11, %11, %cst_4 {dimension_numbers = #tpu.dot_dimension_numbers<[1], [1], [0], [0], [0, 0, 1, 0], [], []>} : vector<4x128xf32>, vector<4x128xf32>, vector<4x4xf32> -> vector<4x4xf32>
    %14 = arith.addf %12, %13 : vector<4x4xf32>
    %c0_5 = arith.constant 0 : index
    %c0_6 = arith.constant 0 : index
    %15 = vector.load %arg3[%c0_5, %c0_6] : memref<4x4xf32, #tpu.memory_space<vmem>>, vector<4x4xf32>
    tpu.vector_store %arg3[%c0_5, %c0_6], %14 {strides = array<i32>} : memref<4x4xf32, #tpu.memory_space<vmem>>, vector<4x4xf32>,
    %c3_i32 = arith.constant 3 : i32
    %16 = arith.cmpi eq, %arg0, %c3_i32 : i32
    %17 = arith.extui %16 : i1 to i32
    %c0_i32_7 = arith.constant 0 : i32
    %18 = arith.cmpi ne, %17, %c0_i32_7 : i32
    scf.if %18 {
      %c0_8 = arith.constant 0 : index
      %c0_9 = arith.constant 0 : index
      %19 = vector.load %arg3[%c0_8, %c0_9] : memref<4x4xf32, #tpu.memory_space<vmem>>, vector<4x4xf32>
      %cst_10 = arith.constant 2.6041668E-4 : f32
      %20 = vector.broadcast %cst_10 : f32 to vector<4x4xf32>
      %21 = arith.mulf %19, %20 : vector<4x4xf32>
      %c0_11 = arith.constant 0 : index
      %c0_12 = arith.constant 0 : index
      %22 = vector.load %arg3[%c0_11, %c0_12] : memref<4x4xf32, #tpu.memory_space<vmem>>, vector<4x4xf32>
      tpu.vector_store %arg3[%c0_11, %c0_12], %21 {strides = array<i32>} : memref<4x4xf32, #tpu.memory_space<vmem>>, vector<4x4xf32>,
      %c0_13 = arith.constant 0 : index
      %c0_14 = arith.constant 0 : index
      %23 = vector.load %arg2[%c0_13, %c0_14] : memref<4x4xf32, #tpu.memory_space<vmem>>, vector<4x4xf32>
      %24 = arith.subf %21, %23 : vector<4x4xf32>
      %25 = arith.mulf %24, %24 : vector<4x4xf32>
      %26 = vector.shape_cast %25 : vector<4x4xf32> to vector<1x4x4xf32>
      %cst_15 = arith.constant dense<0.000000e+00> : vector<1xf32>
      %27 = vector.multi_reduction <add>, %26, %cst_15 [1, 2] : vector<1x4x4xf32> to vector<1xf32>
      %28 = vector.shape_cast %27 : vector<1xf32> to vector<1x1x1xf32>
      %29 = vector.extract %28[0, 0, 0] : f32 from vector<1x1x1xf32>
      %cst_16 = arith.constant 6.250000e-02 : f32
      %30 = arith.mulf %29, %cst_16 : f32
      %c0_17 = arith.constant 0 : index
      %c0_18 = arith.constant 0 : index
      %31 = memref.load %arg4[%c0_17, %c0_18] : memref<1x1xf32, #tpu.memory_space<smem>>
      memref.store %30, %arg4[%c0_17, %c0_18] : memref<1x1xf32, #tpu.memory_space<smem>>
    } else {
    }
    return
  }
  func.func @transform_0(%arg0: i32) -> (i32, i32) {
    %c0_i32 = arith.constant 0 : i32
    %c0_i32_0 = arith.constant 0 : i32
    return %c0_i32, %arg0 : i32, i32
  }
  func.func @transform_1(%arg0: i32) -> (i32, i32) {
    %c0_i32 = arith.constant 0 : i32
    %c0_i32_0 = arith.constant 0 : i32
    %c0_i32_1 = arith.constant 0 : i32
    return %c0_i32, %c0_i32_0 : i32, i32
  }
  func.func @transform_2(%arg0: i32) -> (i32, i32) {
    %c0_i32 = arith.constant 0 : i32
    %c0_i32_0 = arith.constant 0 : i32
    %c0_i32_1 = arith.constant 0 : i32
    return %c0_i32, %c0_i32_0 : i32, i32
  }
  func.func @transform_3(%arg0: i32) -> (i32, i32) {
    %c0_i32 = arith.constant 0 : i32
    %c0_i32_0 = arith.constant 0 : i32
    %c0_i32_1 = arith.constant 0 : i32
    return %c0_i32, %c0_i32_0 : i32, i32
  }
}

</mosaic_0001>

<llo_original>
// kernel: _gram_only.1
$region0: #{_gram_only.1}
  #allocation0 [shape = 'u32[]', space=smem, size = 0x4, offset = 0x4, fixed_abs, tag = 'smem constant byte address 0x4 - core index']
  #allocation1 [shape = 'u32[72,128]{1,0:T(1,128)}', space=vmem, size = 0x9000, scoped, tag = 'internal scratch']
  %s0 = inlined_call_operand.vmem [shape: f32[4,480], index: 0, kind: input, shape index: {}]
  %s1 = inlined_call_operand.vmem [shape: f32[4,4], index: 1, kind: input, shape index: {}]
  %s2 = inlined_call_operand.hbm [shape: f32[4,4], index: 2, kind: output, shape index: {0}]
  %s3 = inlined_call_operand.hbm [shape: f32[1,1], index: 3, kind: output, shape index: {1}]
  %4 = xla_tuple %s2, %s3
  %s5 = sld [smem:[#allocation0]]
  $region57: #{_gram_only.1} parent=0
    _
  %s7 = ssub.s32 1, %s5
  %s8 = scalar_select 0, %s7, %s5
  $region1: #{_gram_only.1} parent=0
    #allocation2 [shape = 'u8[2048]{0}', space=vmem, size = 0x800, scoped, tag = 'output window, operand 0, single buffered']
    #allocation3 [shape = 's32[2]{0}', space=sflag, size = 0x8, scoped, tag = 'scoped memory for _gram_only.1']
    #allocation4 [shape = 's32[2]{0}', space=sflag, size = 0x8, scoped, tag = 'scoped memory for _gram_only.1']
    #allocation5 [shape = 'u8[512]{0}', space=smem, size = 0x200, scoped, tag = 'output window, operand 1, single buffered']
    %9 = vsyncpa [#allocation3], 0
    %10 = vsyncpa [#allocation4], 0
    loop: start=0, step=1, limit=6
    $region2: #{_gram_only.1} parent=1 // loop_pre_header
      _
    $region3: #{_gram_only.1} parent=1 // loop_header
      %s12 = sphi 0, %s16
      %p13 = scmp.ge.s32.totalorder %s12, 6
      %s22 = sphi 0, %s24
      %s25 = sphi 0, %s22
      %s26 = sphi 0, %s25
      %s42 = sphi 0, %s26
      %s46 = sphi 0, %s46
      %s48 = sphi 0, %s46
      %s49 = sphi 0, %s48
      %s63 = sphi 0, %s49
      %s67 = sphi 0, %s67
      %s69 = sphi 0, %s67
      %s70 = sphi 0, %s69
      %s84 = sphi 0, %s70
      %s88 = sphi 0, %s88
      %s90 = sphi 0, %s88
      %s91 = sphi 0, %s90
      %s105 = sphi 0, %s91
    $region4: #{_gram_only.1} parent=1 // loop_header_branch
      %15 = sbr.rel (%p13) target = $region8
    $region5: #{_gram_only.1} parent=1 // loop_body
      %s17 = ssub.s32 %s12, 1
      %s18 = ssub.s32 %s12, 2
      %s19 = sadd.s32 %s12, 1
      %s20 = ssub.s32 %s12, %s19
      %p21 = scmp.eq.s32.totalorder %s20, 0
      %s23 = sadd.s32 %s22, 1
      %s24 = scalar_select %p21, %s22, %s23
      %p27 = pneg %p21
      %p28 = scmp.eq.s32.totalorder %s12, 3
      %p29 = por %p27, %p28
      %p30 = scmp.ne.s32.totalorder %s22, %s25
      %p31 = scmp.eq.s32.totalorder %s12, 0
      %p32 = por %p30, %p31
      %p33 = scmp.ne.s32.totalorder %s22, %s25
      %p34 = scmp.eq.s32.totalorder %s17, 3
      %p35 = por %p33, %p34
      %p36 = scmp.ne.s32.totalorder %s25, %s26
      %p37 = scmp.eq.s32.totalorder %s17, 0
      %p38 = por %p36, %p37
      %p39 = scmp.ne.s32.totalorder %s25, %s26
      %p40 = scmp.eq.s32.totalorder %s18, 3
      %p41 = por %p39, %p40
      %p43 = scmp.ne.s32.totalorder %s26, %s42
      %p44 = scmp.eq.s32.totalorder %s18, 0
      %p45 = por %p43, %p44
      %s47 = sadd.s32 %s46, 1
      %p50 = scmp.eq.s32.totalorder %s12, 3
      %p51 = scmp.ne.s32.totalorder %s46, %s48
      %p52 = scmp.eq.s32.totalorder %s12, 0
      %p53 = por %p51, %p52
      %p54 = scmp.ne.s32.totalorder %s46, %s48
      %p55 = scmp.eq.s32.totalorder %s17, 3
      %p56 = por %p54, %p55
      %p57 = scmp.ne.s32.totalorder %s48, %s49
      %p58 = scmp.eq.s32.totalorder %s17, 0
      %p59 = por %p57, %p58
      %p60 = scmp.ne.s32.totalorder %s48, %s49
      %p61 = scmp.eq.s32.totalorder %s18, 3
      %p62 = por %p60, %p61
      %p64 = scmp.ne.s32.totalorder %s49, %s63
      %p65 = scmp.eq.s32.totalorder %s18, 0
      %p66 = por %p64, %p65
      %s68 = sadd.s32 %s67, 1
      %p71 = scmp.eq.s32.totalorder %s12, 3
      %p72 = scmp.ne.s32.totalorder %s67, %s69
      %p73 = scmp.eq.s32.totalorder %s12, 0
      %p74 = por %p72, %p73
      %p75 = scmp.ne.s32.totalorder %s67, %s69
      %p76 = scmp.eq.s32.totalorder %s17, 3
      %p77 = por %p75, %p76
      %p78 = scmp.ne.s32.totalorder %s69, %s70
      %p79 = scmp.eq.s32.totalorder %s17, 0
      %p80 = por %p78, %p79
      %p81 = scmp.ne.s32.totalorder %s69, %s70
      %p82 = scmp.eq.s32.totalorder %s18, 3
      %p83 = por %p81, %p82
      %p85 = scmp.ne.s32.totalorder %s70, %s84
      %p86 = scmp.eq.s32.totalorder %s18, 0
      %p87 = por %p85, %p86
      %s89 = sadd.s32 %s88, 1
      %p92 = scmp.eq.s32.totalorder %s12, 3
      %p93 = scmp.ne.s32.totalorder %s88, %s90
      %p94 = scmp.eq.s32.totalorder %s12, 0
      %p95 = por %p93, %p94
      %p96 = scmp.ne.s32.totalorder %s88, %s90
      %p97 = scmp.eq.s32.totalorder %s17, 3
      %p98 = por %p96, %p97
      %p99 = scmp.ne.s32.totalorder %s90, %s91
      %p100 = scmp.eq.s32.totalorder %s17, 0
      %p101 = por %p99, %p100
      %p102 = scmp.ne.s32.totalorder %s90, %s91
      %p103 = scmp.eq.s32.totalorder %s18, 3
      %p104 = por %p102, %p103
      %p106 = scmp.ne.s32.totalorder %s91, %s105
      %p107 = scmp.eq.s32.totalorder %s18, 0
      %p108 = por %p106, %p107
      %p109 = scmp.le.s32.totalorder 1, %s12
      %p110 = scmp.lt.s32.totalorder %s12, 5
      %p111 = pnand %p109, %p110
      %p112 = pneg %p111
      // Predicated region
      $region9: #{_gram_only.1} parent=5 // pred_check
        _
      $region10: #{_gram_only.1} parent=5 // pred_check_branch
        %114 = sbr.rel (%p111) target = $region12
      $region11: #{_gram_only.1} parent=5 // pred_region
        %s115 = ssub.s32 %s12, 1
        // Predicated region
        $region13: #{_gram_only.1} parent=11 // pred_check
          %p116 = pneg %p59
        $region14: #{_gram_only.1} parent=11 // pred_check_branch
          %118 = sbr.rel (%p116) target = $region16
        $region15: #{_gram_only.1} parent=11 // pred_region
          _
        $region16: #{_gram_only.1} parent=11 // pred_fallthru
          _
      $region12: #{_gram_only.1} parent=5 // pred_fallthru
        _
      %p119 = scmp.lt.s32.totalorder %s12, 4
      // Predicated region
      $region17: #{_gram_only.1} parent=5 // pred_check
        %p120 = pneg %p119
      $region18: #{_gram_only.1} parent=5 // pred_check_branch
        %122 = sbr.rel (%p120) target = $region20
      $region19: #{_gram_only.1} parent=5 // pred_region
        // Predicated region
        $region21: #{_gram_only.1} parent=19 // pred_check
          %p123 = pneg %p32
        $region22: #{_gram_only.1} parent=19 // pred_check_branch
          %125 = sbr.rel (%p123) target = $region24
        $region23: #{_gram_only.1} parent=19 // pred_region
          %p126 = scmp.lt.s32.totalorder %s12, 3
          %s127 = scalar_select %p126, %s12, 3
          %s128 = smul.addr %s127, 4
          %s129 = scalar_lea.vmem %s0, %s128
        $region24: #{_gram_only.1} parent=19 // pred_fallthru
          _
      $region20: #{_gram_only.1} parent=5 // pred_fallthru
        _
      %p130 = scmp.le.s32.totalorder 1, %s12
      %p131 = scmp.lt.s32.totalorder %s12, 5
      %p132 = pnand %p130, %p131
      %p133 = pneg %p132
      // Predicated region
      $region25: #{_gram_only.1} parent=5 // pred_check
        _
      $region26: #{_gram_only.1} parent=5 // pred_check_branch
        %135 = sbr.rel (%p132) target = $region28
      $region27: #{_gram_only.1} parent=5 // pred_region
        %s136 = ssub.s32 %s12, 1
        %p137 = scmp.lt.s32.totalorder %s17, 3
        %s138 = scalar_select %p137, %s17, 3
        %s139 = smul.addr %s138, 4
        %s140 = scalar_lea.vmem %s0, %s139
        %p141 = pneg %p38
        %p142 = pneg %p35
        %p143 = pneg %p59
        %p144 = pneg %p56
        %p145 = pneg %p80
        %p146 = pneg %p77
        %p147 = pneg %p101
        %p148 = pneg %p98
        %p149 = scmp.lt.s32.totalorder %s17, 3
        %s150 = scalar_select %p149, %s17, 3
        %s151 = smul.addr %s150, 4
        %s152 = scalar_lea.vmem %s0, %s151
        %p153 = scmp.eq.s32.totalorder %s17, 0
        // Predicated region
        $region29: #{_gram_only.1} parent=27 // pred_check
          %p154 = pneg %p153
        $region30: #{_gram_only.1} parent=27 // pred_check_branch
          %156 = sbr.rel (%p154) target = $region32
        $region31: #{_gram_only.1} parent=27 // pred_region
          %vm157 = vcmask 27648
          %158 = vst.msk [vmem:[#allocation2] sm:$0xf] %vm157, 0.0
        $region32: #{_gram_only.1} parent=27 // pred_fallthru
          _
        %v159 = vld [vmem:[%s152] sm:$0xf]
        %v160 = vlaneseq
        %v161 = vand.u32 %v160, 127
        %s162 = smul.u32 %s17, 128
        %v163 = vstv %s162
        %v164 = vadd.s32 %v161, %v163
        %vm165 = vcmp.lt.s32.totalorder %v164, 480
        %v166 = vsel %vm165, %v159, 0.0
        %v167 = vld [vmem:[#allocation2] sm:$0xf]
        %168 = vmatpush.xpose.msra.mxu0 0.0
        %169 = vmatpush.xpose.msra.mxu0 0.0
        %170 = vmatpush.xpose.msra.mxu0 0.0
        %171 = vmatpush.xpose.msra.mxu0 0.0
        %172 = vmatpush.xpose.msra.mxu0 0.0
        %173 = vmatpush.xpose.msra.mxu0 0.0
        %174 = vmatpush.xpose.msra.mxu0 0.0
        %175 = vmatpush.xpose.msra.mxu0 0.0
        %176 = vmatpush.xpose.msra.mxu0 0.0
        %177 = vmatpush.xpose.msra.mxu0 0.0
        %178 = vmatpush.xpose.msra.mxu0 0.0
        %179 = vmatpush.xpose.msra.mxu0 0.0
        %180 = vmatpush.xpose.msra.mxu0 0.0
        %181 = vmatpush.xpose.msra.mxu0 0.0
        %182 = vmatpush.xpose.msra.mxu0 0.0
        %183 = vmatpush.xpose.msra.mxu0 %v166
        %184 = vmatmul.f32.gmra.mxu0 %v166
        %v185 = vpop.f32.mrf.mxu0
        %v186 = vadd.f32 0.0, %v185
        %187 = vdwg.mxu0
        %v188 = vadd.f32 %v167, %v186
        %vm189 = vcmask 27648
        %190 = vst.msk [vmem:[#allocation2] sm:$0xf] %vm189, %v188
        %p191 = scmp.eq.s32.totalorder %s17, 3
        // Predicated region
        $region33: #{_gram_only.1} parent=27 // pred_check
          %p192 = pneg %p191
        $region34: #{_gram_only.1} parent=27 // pred_check_branch
          %194 = sbr.rel (%p192) target = $region36
        $region35: #{_gram_only.1} parent=27 // pred_region
          %v195 = vld [vmem:[#allocation2] sm:$0xf]
          %v196 = vmul.f32 %v195, 0.00026041668
          %197 = vst.msk [vmem:[#allocation2] sm:$0xf] %vm189, %v196
          %v198 = vld [vmem:[%s1] sm:$0xf]
          %v199 = vsub.f32 %v196, %v198
          %v200 = vmul.f32 %v199, %v199
          %v201 = vsel %vm189, %v200, 0.0
          %202 = vadd.xlane.f32.xlu0 %v201
          %v203 = vpop.xlane.xlu0 %202
          %v204 = vrot.slane %v203, 4
          %v205 = vadd.f32 %v203, %v204
          %v206 = vrot.slane %v205, 2
          %v207 = vadd.f32 %v205, %v206
          %v208 = vrot.slane %v207, 1
          %v209 = vadd.f32 %v207, %v208
          %s210 = vtos %v209
          %s211 = smul.f32 %s210, 0.0625
          %s212 = scalar_lea.smem [#allocation5], 0
          %213 = sst [smem:[%s212]] %s211
        $region36: #{_gram_only.1} parent=27 // pred_fallthru
          _
        // Predicated region
        $region37: #{_gram_only.1} parent=27 // pred_check
          %p214 = pneg %p77
        $region38: #{_gram_only.1} parent=27 // pred_check_branch
          %216 = sbr.rel (%p214) target = $region40
        $region39: #{_gram_only.1} parent=27 // pred_region
          %218 = vsyncadd [#allocation3], 0
          %s220 = sshll.u32 [#allocation2], 4
          %s221 = int_to_ptr.vmem [resolvable:$true] %s220
          %s222 = sshll.u32 %s2, 4
          %s223 = int_to_ptr.hbm [resolvable:$true] %s222
          %225 = dma.vmem_to_hbm [thread:$0]  %s221, 64, %s223, [#allocation3]
        $region40: #{_gram_only.1} parent=27 // pred_fallthru
          _
        // Predicated region
        $region41: #{_gram_only.1} parent=27 // pred_check
          %p226 = pneg %p98
        $region42: #{_gram_only.1} parent=27 // pred_check_branch
          %228 = sbr.rel (%p226) target = $region44
        $region43: #{_gram_only.1} parent=27 // pred_region
          %230 = vsyncadd [#allocation4], 0
          %s232 = sshll.u32 %s3, 4
          %s233 = int_to_ptr.hbm [resolvable:$true] %s232
          %235 = dma.smem_to_hbm [#allocation5], 16, %s233, [#allocation4]
        $region44: #{_gram_only.1} parent=27 // pred_fallthru
          _
        // Predicated region
        $region45: #{_gram_only.1} parent=27 // pred_check
          %p236 = pneg %p77
        $region46: #{_gram_only.1} parent=27 // pred_check_branch
          %238 = sbr.rel (%p236) target = $region48
        $region47: #{_gram_only.1} parent=27 // pred_region
          %240 = dma.done [#allocation3], 64
        $region48: #{_gram_only.1} parent=27 // pred_fallthru
          _
        // Predicated region
        $region49: #{_gram_only.1} parent=27 // pred_check
          %p241 = pneg %p98
        $region50: #{_gram_only.1} parent=27 // pred_check_branch
          %243 = sbr.rel (%p241) target = $region52
        $region51: #{_gram_only.1} parent=27 // pred_region
          %245 = dma.done [#allocation4], 16
        $region52: #{_gram_only.1} parent=27 // pred_fallthru
          _
        %246 = sfence
      $region28: #{_gram_only.1} parent=5 // pred_fallthru
        _
      %p247 = scmp.le.s32.totalorder 2, %s12
      // Predicated region
      $region53: #{_gram_only.1} parent=5 // pred_check
        %p248 = pneg %p247
      $region54: #{_gram_only.1} parent=5 // pred_check_branch
        %250 = sbr.rel (%p248) target = $region56
      $region55: #{_gram_only.1} parent=5 // pred_region
        %s251 = ssub.s32 %s12, 2
      $region56: #{_gram_only.1} parent=5 // pred_fallthru
        _
    $region6: #{_gram_only.1} parent=1 // loop_footer
      %s16 = sadd.s32 1, %s12
    $region7: #{_gram_only.1} parent=1 // loop_footer_branch
      %11 = sbr.rel target = $region3
    $region8: #{_gram_only.1} parent=1 // loop_exit
      _
    %252 = vsyncpa [#allocation3], 1
    %s253 = scalar_lea.sflag [#allocation3], 1
    %254 = vsyncpa %s253, 1
    %255 = vsyncpa [#allocation4], 1
    %s256 = scalar_lea.sflag [#allocation4], 1
    %257 = vsyncpa %s256, 1

</llo_original>
